<compile_context>
chip_gen: v5e
topology: v5e:2x2
jax: 0.10.0
libtpu: 0.0.40
codegen_flags: <defaults>
</compile_context>

<pallas_src>
import functools

import jax
import jax.numpy as jnp
from jax.experimental import pallas as pl
from jax.experimental.pallas import tpu as pltpu

BN_EPS = 1e-5

_LANE = 128   # OC / K alignment. NOTE: the review suggests 256 on v6e/v7x to fully
              # feed the 256x256 MXU, but this kernel is HBM-bound on every
              # generation; padding small OC/K to 256 would add HBM bytes for zero
              # MXU benefit, and layers with OC,K >= 256 already present >=256-wide
              # operands after 128-alignment.  Kept at 128 on purpose.
_TK_MAX = 2048  # contraction-tile bound so per-step VMEM is shape-independent (v7x).


def _round_up(x, m):
    return (x + m - 1) // m * m


@functools.lru_cache(maxsize=None)
def _vmem_limit_bytes():
    # ~3/4 of physical VMEM, capped at 96 MiB (v5e/v6e: 128 MiB -> 96 MiB,
    # v7x: 64 MiB -> 48 MiB).  Falls back to a v7x-safe 48 MiB.
    try:
        cap = pltpu.get_tpu_info().vmem_capacity_bytes
        return int(min(cap * 3 // 4, 96 * 1024 * 1024))
    except Exception:
        return 48 * 1024 * 1024


def _conv_stats_kernel(p_ref, w_ref, conv_ref, stats_ref, acc_ref):
    """Pass 1: K-tiled bf16 MXU matmul with f32 accumulation.

    On the last K step the conv tile is stored as bf16 and the per-(image, M-tile)
    partial sum / sum-of-squares rows are written once (no RMW, no shared state),
    keeping the N / M grid axes race-free and parallel.
    """
    k = pl.program_id(2)

    @pl.when(k == 0)
    def _():
        acc_ref[...] = jnp.zeros_like(acc_ref)

    acc_ref[...] += jnp.dot(p_ref[0], w_ref[...], preferred_element_type=jnp.float32)

    @pl.when(k == pl.num_programs(2) - 1)
    def _():
        acc = acc_ref[...]
        conv_ref[0] = acc.astype(conv_ref.dtype)
        stats_ref[...] = jnp.zeros_like(stats_ref)            # rows 2..7 unused
        stats_ref[0:1, :] = jnp.sum(acc, axis=0, keepdims=True)
        stats_ref[1:2, :] = jnp.sum(acc * acc, axis=0, keepdims=True)


def _bn_relu_transpose_kernel(conv_ref, scale_ref, shift_ref, o_ref):
    """Pass 2: relu(conv * scale + shift) with the NHWC->NCHW permutation folded
    into the store (tile transposed to (OC, M) before the lane-dense write)."""
    y = conv_ref[0].astype(jnp.float32) * scale_ref[...] + shift_ref[...]
    o_ref[0] = jnp.maximum(y, 0.0).T


def _im2col(x, kh, kw, stride, padding):
    # (N, C, H, W) -> (N, OH*OW, C*KH*KW); K ordered (C, KH, KW) to match
    # weight.reshape(OC, C*KH*KW).
    n, c, h, w = x.shape
    xp = jnp.pad(x, ((0, 0), (0, 0), (padding, padding), (padding, padding)))
    oh = (h + 2 * padding - kh) // stride + 1
    ow = (w + 2 * padding - kw) // stride + 1
    cols = []
    for i in range(kh):
        for j in range(kw):
            cols.append(xp[:, :, i:i + stride * oh:stride, j:j + stride * ow:stride])
    col = jnp.stack(cols, axis=2)            # (N, C, KH*KW, OH, OW)
    col = col.transpose(0, 3, 4, 1, 2)       # (N, OH, OW, C, KH*KW)
    return col.reshape(n, oh * ow, c * kh * kw), oh, ow


@functools.partial(jax.jit, static_argnames=("stride", "padding", "tm"))
def conv_block(x, weight, gamma, beta, *, stride, padding, tm=1024):
    """x: (N, C, H, W); weight: (OC, C, KH, KW); gamma/beta: (OC,). Returns NCHW f32."""
    n, c, h, w = x.shape
    oc, _, kh, kw = weight.shape

    # im2col patches built directly in bf16 (MXU-native dtype, half the HBM bytes).
    patches, oh, ow = _im2col(x.astype(jnp.bfloat16), kh, kw, stride, padding)
    m_img = oh * ow
    k = c * kh * kw

    # Lane / MXU friendly padding + bounded K tiling.
    oc_pad = _round_up(oc, _LANE)
    k_aligned = _round_up(k, _LANE)
    n_k = pl.cdiv(k_aligned, _TK_MAX)
    tk = _round_up(pl.cdiv(k_aligned, n_k), _LANE)
    k_pad = tk * n_k
    tm = _round_up(min(tm, _round_up(m_img, _LANE)), _LANE)
    m_pad = _round_up(m_img, tm)
    n_m = m_pad // tm

    # Single combined pad (fused by XLA with the producing transpose/reshape); the
    # zero rows/columns contribute nothing to the matmul or the statistics.
    patches_p = jnp.pad(patches, ((0, 0), (0, m_pad - m_img), (0, k_pad - k)))
    w_mat = weight.reshape(oc, k).astype(jnp.bfloat16).T          # (K, OC)
    w_p = jnp.pad(w_mat, ((0, k_pad - k), (0, oc_pad - oc)))

    vmem_limit = _vmem_limit_bytes()

    # ---- Pass 1: bf16 conv tiles + per-tile partial sum / sumsq ----
    conv, stats = pl.pallas_call(
        _conv_stats_kernel,
        out_shape=(
            jax.ShapeDtypeStruct((n, m_pad, oc_pad), jnp.bfloat16),
            jax.ShapeDtypeStruct((n * n_m * 8, oc_pad), jnp.float32),
        ),
        grid_spec=pltpu.PrefetchScalarGridSpec(
            num_scalar_prefetch=0,
            grid=(n, n_m, n_k),
            in_specs=[
                pl.BlockSpec((1, tm, tk), lambda b, i, kk: (b, i, kk)),
                pl.BlockSpec((tk, oc_pad), lambda b, i, kk: (kk, 0)),
            ],
            out_specs=[
                pl.BlockSpec((1, tm, oc_pad), lambda b, i, kk: (b, i, 0)),
                pl.BlockSpec((8, oc_pad), lambda b, i, kk: (b * n_m + i, 0)),
            ],
            scratch_shapes=[pltpu.VMEM((tm, oc_pad), jnp.float32)],
        ),
        compiler_params=pltpu.CompilerParams(
            dimension_semantics=("parallel", "parallel", "arbitrary"),
            vmem_limit_bytes=vmem_limit,
        ),
    )(patches_p, w_p)

    # ---- Tiny XLA epilogue: Chan-style combination of per-tile partial stats,
    #      then precompute scale/shift so pass 2 is a pure FMA + ReLU. ----
    stats = stats.reshape(n, n_m, 8, oc_pad)
    s1 = stats[:, :, 0, :]                                        # (N, n_m, OCp)
    s2 = stats[:, :, 1, :]
    m_total = float(n * m_img)
    cnt = jnp.minimum(tm, m_img - jnp.arange(n_m) * tm).astype(jnp.float32)
    cnt = cnt[None, :, None]                                      # valid rows / tile
    tile_mean = s1 / cnt
    tile_m2 = s2 - s1 * tile_mean
    mean = jnp.sum(s1, axis=(0, 1)) / m_total                     # (OCp,)
    m2 = (jnp.sum(tile_m2, axis=(0, 1))
          + jnp.sum(cnt * (tile_mean - mean) ** 2, axis=(0, 1)))
    var = jnp.maximum(m2 / m_total, 0.0)
    inv = jax.lax.rsqrt(var + BN_EPS)
    g_p = jnp.pad(gamma.astype(jnp.float32), (0, oc_pad - oc))
    b_p = jnp.pad(beta.astype(jnp.float32), (0, oc_pad - oc))
    scale_v = g_p * inv
    shift_v = b_p - mean * scale_v
    scale = scale_v.reshape(1, oc_pad)
    shift = shift_v.reshape(1, oc_pad)

    # ---- Pass 2: BN + ReLU with the NHWC->NCHW permutation folded into the store.
    # (input_output_aliases intentionally not used: the conv intermediate is bf16
    #  (M, OC) while the output is f32 (OC, M), so in-place reuse is impossible.)
    out_t = pl.pallas_call(
        _bn_relu_transpose_kernel,
        out_shape=jax.ShapeDtypeStruct((n, oc_pad, m_pad), jnp.float32),
        grid_spec=pltpu.PrefetchScalarGridSpec(
            num_scalar_prefetch=0,
            grid=(n, n_m),
            in_specs=[
                pl.BlockSpec((1, tm, oc_pad), lambda b, i: (b, i, 0)),
                pl.BlockSpec((1, oc_pad), lambda b, i: (0, 0)),
                pl.BlockSpec((1, oc_pad), lambda b, i: (0, 0)),
            ],
            out_specs=pl.BlockSpec((1, oc_pad, tm), lambda b, i: (b, 0, i)),
        ),
        compiler_params=pltpu.CompilerParams(
            dimension_semantics=("parallel", "parallel"),
            vmem_limit_bytes=vmem_limit,
        ),
    )(conv, scale, shift)

    # Output already leaves the kernel channel-major; only a cheap slice of the
    # padded OC / M tails remains (padded rows/channels are relu(shift)/0 and are
    # dropped here, never reduced over).
    return out_t[:, :oc, :m_img].reshape(n, oc, oh, ow)


def _reference(x, weight, gamma, beta, stride, padding):
    # Plain-JAX f32 reference: conv + training-mode BN + relu.
    conv = jax.lax.conv_general_dilated(
        x.astype(jnp.float32), weight.astype(jnp.float32),
        window_strides=(stride, stride),
        padding=[(padding, padding), (padding, padding)],
        dimension_numbers=("NCHW", "OIHW", "NCHW"))
    mean = conv.mean(axis=(0, 2, 3), keepdims=True)
    var = ((conv - mean) ** 2).mean(axis=(0, 2, 3), keepdims=True)
    y = (conv - mean) * jax.lax.rsqrt(var + BN_EPS)
    y = y * gamma.reshape(1, -1, 1, 1) + beta.reshape(1, -1, 1, 1)
    return jnp.maximum(y, 0.0)


if __name__ == "__main__":
    # Small shapes consistent with the module (batch of NCHW images).
    N, C_IN, H, W = 2, 4, 16, 16
    C_OUT, KS, STRIDE, PAD = 8, 3, 1, 1

    key = jax.random.PRNGKey(0)
    kx, kw2, kg, kb = jax.random.split(key, 4)
    x = jax.random.normal(kx, (N, C_IN, H, W), dtype=jnp.float32)
    weight = 0.1 * jax.random.normal(kw2, (C_OUT, C_IN, KS, KS), dtype=jnp.float32)
    gamma = 1.0 + 0.1 * jax.random.normal(kg, (C_OUT,), dtype=jnp.float32)
    beta = 0.1 * jax.random.normal(kb, (C_OUT,), dtype=jnp.float32)

    # tm=128 -> 2 M-tiles per image x 2 images, exercising the per-tile partial
    # stats + Chan combination path; the production default is tm=1024.
    out = conv_block(x, weight, gamma, beta, stride=STRIDE, padding=PAD, tm=128)
    out = jax.block_until_ready(out)

    ref = _reference(x, weight, gamma, beta, STRIDE, PAD)
    assert out.shape == (N, C_OUT, H, W), out.shape
    # bf16 MXU operands (f32 accumulation) -> looser tolerance than a pure-f32 run.
    max_err = float(jnp.max(jnp.abs(out - ref)))
    assert max_err < 5e-2, max_err

    print("KERNEL_OK")
</pallas_src>

<mosaic_0001>
module attributes {stable_mosaic.version = 11 : i64} {
  func.func @_conv_stats_kernel(%arg0: i32, %arg1: i32, %arg2: i32, %arg3: memref<1x128x128xbf16, #tpu.memory_space<vmem>>, %arg4: memref<128x128xbf16, #tpu.memory_space<vmem>>, %arg5: memref<1x128x128xbf16, #tpu.memory_space<vmem>>, %arg6: memref<8x128xf32, #tpu.memory_space<vmem>>, %arg7: memref<128x128xf32, #tpu.memory_space<vmem>>) attributes {dimension_semantics = [#tpu.dimension_semantics<parallel>, #tpu.dimension_semantics<parallel>, #tpu.dimension_semantics<arbitrary>], iteration_bounds = array<i64: 2, 2, 1>, scalar_prefetch = 0 : i64, scratch_operands = 1 : i64, tpu.core_type = #tpu.core_type<tc>, window_params = [{transform_indices = @transform_0, window_bounds = array<i64: 1, 128, 128>}, {transform_indices = @transform_1, window_bounds = array<i64: 128, 128>}, {transform_indices = @transform_2, window_bounds = array<i64: 1, 128, 128>}, {transform_indices = @transform_3, window_bounds = array<i64: 8, 128>}]} {
    %c0_i32 = arith.constant 0 : i32
    %0 = arith.cmpi eq, %arg2, %c0_i32 : i32
    %1 = arith.extui %0 : i1 to i32
    %c0_i32_0 = arith.constant 0 : i32
    %2 = arith.cmpi ne, %1, %c0_i32_0 : i32
    scf.if %2 {
      %cst_11 = arith.constant 0.000000e+00 : f32
      %13 = vector.broadcast %cst_11 : f32 to vector<128x128xf32>
      %c0_12 = arith.constant 0 : index
      %c0_13 = arith.constant 0 : index
      %14 = vector.load %arg7[%c0_12, %c0_13] : memref<128x128xf32, #tpu.memory_space<vmem>>, vector<128x128xf32>
      tpu.vector_store %arg7[%c0_12, %c0_13], %13 {strides = array<i32>} : memref<128x128xf32, #tpu.memory_space<vmem>>, vector<128x128xf32>,
    } else {
    }
    %c0 = arith.constant 0 : index
    %c0_1 = arith.constant 0 : index
    %3 = vector.load %arg7[%c0, %c0_1] : memref<128x128xf32, #tpu.memory_space<vmem>>, vector<128x128xf32>
    %c0_2 = arith.constant 0 : index
    %c0_3 = arith.constant 0 : index
    %c0_4 = arith.constant 0 : index
    %4 = vector.load %arg3[%c0_2, %c0_3, %c0_4] : memref<1x128x128xbf16, #tpu.memory_space<vmem>>, vector<1x128x128xbf16>
    %5 = vector.shape_cast %4 : vector<1x128x128xbf16> to vector<128x128xbf16>
    %c0_5 = arith.constant 0 : index
    %c0_6 = arith.constant 0 : index
    %6 = vector.load %arg4[%c0_5, %c0_6] : memref<128x128xbf16, #tpu.memory_space<vmem>>, vector<128x128xbf16>
    %cst = arith.constant dense<0.000000e+00> : vector<128x128xf32>
    %7 = tpu.matmul %5, %6, %cst {dimension_numbers = #tpu.dot_dimension_numbers<[1], [0], [0], [1], [0, 0, 1, 1], [], []>} : vector<128x128xbf16>, vector<128x128xbf16>, vector<128x128xf32> -> vector<128x128xf32>
    %8 = arith.addf %3, %7 : vector<128x128xf32>
    %c0_7 = arith.constant 0 : index
    %c0_8 = arith.constant 0 : index
    %9 = vector.load %arg7[%c0_7, %c0_8] : memref<128x128xf32, #tpu.memory_space<vmem>>, vector<128x128xf32>
    tpu.vector_store %arg7[%c0_7, %c0_8], %8 {strides = array<i32>} : memref<128x128xf32, #tpu.memory_space<vmem>>, vector<128x128xf32>,
    %c0_i32_9 = arith.constant 0 : i32
    %10 = arith.cmpi eq, %arg2, %c0_i32_9 : i32
    %11 = arith.extui %10 : i1 to i32
    %c0_i32_10 = arith.constant 0 : i32
    %12 = arith.cmpi ne, %11, %c0_i32_10 : i32
    scf.if %12 {
      %c0_11 = arith.constant 0 : index
      %c0_12 = arith.constant 0 : index
      %13 = vector.load %arg7[%c0_11, %c0_12] : memref<128x128xf32, #tpu.memory_space<vmem>>, vector<128x128xf32>
      %14 = arith.truncf %13 : vector<128x128xf32> to vector<128x128xbf16>
      %c0_13 = arith.constant 0 : index
      %c0_14 = arith.constant 0 : index
      %c0_15 = arith.constant 0 : index
      %15 = vector.load %arg5[%c0_13, %c0_14, %c0_15] : memref<1x128x128xbf16, #tpu.memory_space<vmem>>, vector<1x128x128xbf16>
      %16 = vector.shape_cast %15 : vector<1x128x128xbf16> to vector<128x128xbf16>
      %17 = vector.shape_cast %14 : vector<128x128xbf16> to vector<1x128x128xbf16>
      tpu.vector_store %arg5[%c0_13, %c0_14, %c0_15], %17 {strides = array<i32>} : memref<1x128x128xbf16, #tpu.memory_space<vmem>>, vector<1x128x128xbf16>,
      %cst_16 = arith.constant 0.000000e+00 : f32
      %18 = vector.broadcast %cst_16 : f32 to vector<8x128xf32>
      %c0_17 = arith.constant 0 : index
      %c0_18 = arith.constant 0 : index
      %19 = vector.load %arg6[%c0_17, %c0_18] : memref<8x128xf32, #tpu.memory_space<vmem>>, vector<8x128xf32>
      tpu.vector_store %arg6[%c0_17, %c0_18], %18 {strides = array<i32>} : memref<8x128xf32, #tpu.memory_space<vmem>>, vector<8x128xf32>,
      %cst_19 = arith.constant dense<0.000000e+00> : vector<128xf32>
      %20 = vector.multi_reduction <add>, %13, %cst_19 [0] : vector<128x128xf32> to vector<128xf32>
      %21 = vector.shape_cast %20 : vector<128xf32> to vector<1x128xf32>
      %c0_20 = arith.constant 0 : index
      %c0_21 = arith.constant 0 : index
      %22 = vector.load %arg6[%c0_20, %c0_21] : memref<8x128xf32, #tpu.memory_space<vmem>>, vector<1x128xf32>
      tpu.vector_store %arg6[%c0_20, %c0_21], %21 {strides = array<i32>} : memref<8x128xf32, #tpu.memory_space<vmem>>, vector<1x128xf32>,
      %23 = arith.mulf %13, %13 : vector<128x128xf32>
      %cst_22 = arith.constant dense<0.000000e+00> : vector<128xf32>
      %24 = vector.multi_reduction <add>, %23, %cst_22 [0] : vector<128x128xf32> to vector<128xf32>
      %25 = vector.shape_cast %24 : vector<128xf32> to vector<1x128xf32>
      %c1 = arith.constant 1 : index
      %c0_23 = arith.constant 0 : index
      %26 = vector.load %arg6[%c1, %c0_23] : memref<8x128xf32, #tpu.memory_space<vmem>>, vector<1x128xf32>
      tpu.vector_store %arg6[%c1, %c0_23], %25 {strides = array<i32>} : memref<8x128xf32, #tpu.memory_space<vmem>>, vector<1x128xf32>,
    } else {
    }
    return
  }
  func.func @transform_0(%arg0: i32, %arg1: i32, %arg2: i32) -> (i32, i32, i32) {
    %c0_i32 = arith.constant 0 : i32
    return %arg0, %arg1, %arg2 : i32, i32, i32
  }
  func.func @transform_1(%arg0: i32, %arg1: i32, %arg2: i32) -> (i32, i32) {
    %c0_i32 = arith.constant 0 : i32
    %c0_i32_0 = arith.constant 0 : i32
    return %arg2, %c0_i32 : i32, i32
  }
  func.func @transform_2(%arg0: i32, %arg1: i32, %arg2: i32) -> (i32, i32, i32) {
    %c0_i32 = arith.constant 0 : i32
    %c0_i32_0 = arith.constant 0 : i32
    return %arg0, %arg1, %c0_i32 : i32, i32, i32
  }
  func.func @transform_3(%arg0: i32, %arg1: i32, %arg2: i32) -> (i32, i32) {
    %c2_i32 = arith.constant 2 : i32
    %0 = arith.muli %arg0, %c2_i32 : i32
    %1 = arith.addi %0, %arg1 : i32
    %c0_i32 = arith.constant 0 : i32
    %c0_i32_0 = arith.constant 0 : i32
    return %1, %c0_i32 : i32, i32
  }
}

module attributes {stable_mosaic.version = 11 : i64} {
  func.func @_bn_relu_transpose_kernel(%arg0: i32, %arg1: i32, %arg2: memref<1x128x128xbf16, #tpu.memory_space<vmem>>, %arg3: memref<1x128xf32, #tpu.memory_space<vmem>>, %arg4: memref<1x128xf32, #tpu.memory_space<vmem>>, %arg5: memref<1x128x128xf32, #tpu.memory_space<vmem>>) attributes {dimension_semantics = [#tpu.dimension_semantics<parallel>, #tpu.dimension_semantics<parallel>], iteration_bounds = array<i64: 2, 2>, scalar_prefetch = 0 : i64, scratch_operands = 0 : i64, tpu.core_type = #tpu.core_type<tc>, window_params = [{transform_indices = @transform_0, window_bounds = array<i64: 1, 128, 128>}, {pipeline_mode = #tpu.pipeline_mode<synchronous>, transform_indices = @transform_1, window_bounds = array<i64: 1, 128>}, {pipeline_mode = #tpu.pipeline_mode<synchronous>, transform_indices = @transform_2, window_bounds = array<i64: 1, 128>}, {transform_indices = @transform_3, window_bounds = array<i64: 1, 128, 128>}]} {
    %c0 = arith.constant 0 : index
    %c0_0 = arith.constant 0 : index
    %c0_1 = arith.constant 0 : index
    %0 = vector.load %arg2[%c0, %c0_0, %c0_1] : memref<1x128x128xbf16, #tpu.memory_space<vmem>>, vector<1x128x128xbf16>
    %1 = vector.shape_cast %0 : vector<1x128x128xbf16> to vector<128x128xbf16>
    %2 = arith.extf %1 : vector<128x128xbf16> to vector<128x128xf32>
    %c0_2 = arith.constant 0 : index
    %c0_3 = arith.constant 0 : index
    %3 = vector.load %arg3[%c0_2, %c0_3] : memref<1x128xf32, #tpu.memory_space<vmem>>, vector<1x128xf32>
    %4 = vector.broadcast %3 : vector<1x128xf32> to vector<128x128xf32>
    %5 = arith.mulf %2, %4 : vector<128x128xf32>
    %c0_4 = arith.constant 0 : index
    %c0_5 = arith.constant 0 : index
    %6 = vector.load %arg4[%c0_4, %c0_5] : memref<1x128xf32, #tpu.memory_space<vmem>>, vector<1x128xf32>
    %7 = vector.broadcast %6 : vector<1x128xf32> to vector<128x128xf32>
    %8 = arith.addf %5, %7 : vector<128x128xf32>
    %cst = arith.constant 0.000000e+00 : f32
    %9 = vector.broadcast %cst : f32 to vector<128x128xf32>
    %10 = arith.maximumf %8, %9 : vector<128x128xf32>
    %11 = tpu.transpose %10, [1, 0] : vector<128x128xf32> -> vector<128x128xf32>
    %c0_6 = arith.constant 0 : index
    %c0_7 = arith.constant 0 : index
    %c0_8 = arith.constant 0 : index
    %12 = vector.load %arg5[%c0_6, %c0_7, %c0_8] : memref<1x128x128xf32, #tpu.memory_space<vmem>>, vector<1x128x128xf32>
    %13 = vector.shape_cast %12 : vector<1x128x128xf32> to vector<128x128xf32>
    %14 = vector.shape_cast %11 : vector<128x128xf32> to vector<1x128x128xf32>
    tpu.vector_store %arg5[%c0_6, %c0_7, %c0_8], %14 {strides = array<i32>} : memref<1x128x128xf32, #tpu.memory_space<vmem>>, vector<1x128x128xf32>,
    return
  }
  func.func @transform_0(%arg0: i32, %arg1: i32) -> (i32, i32, i32) {
    %c0_i32 = arith.constant 0 : i32
    %c0_i32_0 = arith.constant 0 : i32
    return %arg0, %arg1, %c0_i32 : i32, i32, i32
  }
  func.func @transform_1(%arg0: i32, %arg1: i32) -> (i32, i32) {
    %c0_i32 = arith.constant 0 : i32
    %c0_i32_0 = arith.constant 0 : i32
    %c0_i32_1 = arith.constant 0 : i32
    return %c0_i32, %c0_i32_0 : i32, i32
  }
  func.func @transform_2(%arg0: i32, %arg1: i32) -> (i32, i32) {
    %c0_i32 = arith.constant 0 : i32
    %c0_i32_0 = arith.constant 0 : i32
    %c0_i32_1 = arith.constant 0 : i32
    return %c0_i32, %c0_i32_0 : i32, i32
  }
  func.func @transform_3(%arg0: i32, %arg1: i32) -> (i32, i32, i32) {
    %c0_i32 = arith.constant 0 : i32
    %c0_i32_0 = arith.constant 0 : i32
    return %arg0, %c0_i32, %arg1 : i32, i32, i32
  }
}

</mosaic_0001>

<llo_original>
// kernel: conv_block.3
$region0: #{conv_block.3}
  #allocation0 [shape = 'u32[]', space=smem, size = 0x4, offset = 0x4, fixed_abs, tag = 'smem constant byte address 0x4 - core index']
  #allocation1 [shape = 'u32[72,128]{1,0:T(1,128)}', space=vmem, size = 0x9000, scoped, tag = 'internal scratch']
  %s0 = inlined_call_operand.vmem [shape: bf16[2,256,128], index: 0, kind: input, shape index: {}]
  %s1 = inlined_call_operand.vmem [shape: f32[1,128], index: 1, kind: input, shape index: {}]
  %s2 = inlined_call_operand.vmem [shape: f32[1,128], index: 2, kind: input, shape index: {}]
  %s3 = inlined_call_operand.vmem [shape: f32[2,128,256], index: 3, kind: output, shape index: {}]
  %s4 = sld [smem:[#allocation0]]
  $region79: #{conv_block.3} parent=0
    _
  %s6 = ssub.s32 1, %s4
  %s7 = scalar_select 0, %s6, %s4
  $region1: #{conv_block.3} parent=0
    #allocation2 [shape = 'u8[131072]{0}', space=vmem, size = 0x20000, scoped, tag = 'output window, operand 0']
    loop: start=0, step=1, limit=6
    $region2: #{conv_block.3} parent=1 // loop_pre_header
      _
    $region3: #{conv_block.3} parent=1 // loop_header
      %s9 = sphi 0, %s13
      %p10 = scmp.ge.s32.totalorder %s9, 6
      %s16 = sphi 0, %s28
      %s17 = sphi 0, %s24
      %s18 = sphi 0, %s16
      %s19 = sphi 0, %s17
      %s20 = sphi 0, %s18
      %s21 = sphi 0, %s19
      %s33 = sphi 0, %s35
      %s36 = sphi 0, %s33
      %s37 = sphi 0, %s36
      %s53 = sphi 0, %s37
      %s57 = sphi 0, %s57
      %s59 = sphi 0, %s57
      %s60 = sphi 0, %s59
      %s74 = sphi 0, %s60
      %s78 = sphi 0, %s78
      %s80 = sphi 0, %s78
      %s81 = sphi 0, %s80
      %s95 = sphi 0, %s81
      %s103 = sphi 0, %s105
      %s106 = sphi 0, %s103
      %s107 = sphi 0, %s106
      %s123 = sphi 0, %s107
    $region4: #{conv_block.3} parent=1 // loop_header_branch
      %12 = sbr.rel (%p10) target = $region8
    $region5: #{conv_block.3} parent=1 // loop_body
      %s14 = ssub.s32 %s9, 1
      %s15 = ssub.s32 %s9, 2
      %s22 = sadd.s32 1, %s17
      %p23 = scmp.ge.s32.totalorder %s22, 2
      %s24 = scalar_select %p23, 0, %s22
      %s25 = sadd.s32 1, %s16
      %s26 = scalar_select %p23, %s25, %s16
      %p27 = scmp.ge.s32.totalorder %s26, 2
      %s28 = scalar_select %p27, 0, %s26
      %s29 = ssub.s32 %s16, %s28
      %s30 = ssub.s32 %s17, %s24
      %s31 = sor.u32 %s29, %s30
      %p32 = scmp.eq.s32.totalorder %s31, 0
      %s34 = sadd.s32 %s33, 1
      %s35 = scalar_select %p32, %s33, %s34
      %p38 = pneg %p32
      %p39 = scmp.eq.s32.totalorder %s9, 3
      %p40 = por %p38, %p39
      %p41 = scmp.ne.s32.totalorder %s33, %s36
      %p42 = scmp.eq.s32.totalorder %s9, 0
      %p43 = por %p41, %p42
      %p44 = scmp.ne.s32.totalorder %s33, %s36
      %p45 = scmp.eq.s32.totalorder %s14, 3
      %p46 = por %p44, %p45
      %p47 = scmp.ne.s32.totalorder %s36, %s37
      %p48 = scmp.eq.s32.totalorder %s14, 0
      %p49 = por %p47, %p48
      %p50 = scmp.ne.s32.totalorder %s36, %s37
      %p51 = scmp.eq.s32.totalorder %s15, 3
      %p52 = por %p50, %p51
      %p54 = scmp.ne.s32.totalorder %s37, %s53
      %p55 = scmp.eq.s32.totalorder %s15, 0
      %p56 = por %p54, %p55
      %s58 = sadd.s32 %s57, 1
      %p61 = scmp.eq.s32.totalorder %s9, 3
      %p62 = scmp.ne.s32.totalorder %s57, %s59
      %p63 = scmp.eq.s32.totalorder %s9, 0
      %p64 = por %p62, %p63
      %p65 = scmp.ne.s32.totalorder %s57, %s59
      %p66 = scmp.eq.s32.totalorder %s14, 3
      %p67 = por %p65, %p66
      %p68 = scmp.ne.s32.totalorder %s59, %s60
      %p69 = scmp.eq.s32.totalorder %s14, 0
      %p70 = por %p68, %p69
      %p71 = scmp.ne.s32.totalorder %s59, %s60
      %p72 = scmp.eq.s32.totalorder %s15, 3
      %p73 = por %p71, %p72
      %p75 = scmp.ne.s32.totalorder %s60, %s74
      %p76 = scmp.eq.s32.totalorder %s15, 0
      %p77 = por %p75, %p76
      %s79 = sadd.s32 %s78, 1
      %p82 = scmp.eq.s32.totalorder %s9, 3
      %p83 = scmp.ne.s32.totalorder %s78, %s80
      %p84 = scmp.eq.s32.totalorder %s9, 0
      %p85 = por %p83, %p84
      %p86 = scmp.ne.s32.totalorder %s78, %s80
      %p87 = scmp.eq.s32.totalorder %s14, 3
      %p88 = por %p86, %p87
      %p89 = scmp.ne.s32.totalorder %s80, %s81
      %p90 = scmp.eq.s32.totalorder %s14, 0
      %p91 = por %p89, %p90
      %p92 = scmp.ne.s32.totalorder %s80, %s81
      %p93 = scmp.eq.s32.totalorder %s15, 3
      %p94 = por %p92, %p93
      %p96 = scmp.ne.s32.totalorder %s81, %s95
      %p97 = scmp.eq.s32.totalorder %s15, 0
      %p98 = por %p96, %p97
      %s99 = ssub.s32 %s16, %s28
      %s100 = ssub.s32 %s17, %s24
      %s101 = sor.u32 %s99, %s100
      %p102 = scmp.eq.s32.totalorder %s101, 0
      %s104 = sadd.s32 %s103, 1
      %s105 = scalar_select %p102, %s103, %s104
      %p108 = pneg %p102
      %p109 = scmp.eq.s32.totalorder %s9, 3
      %p110 = por %p108, %p109
      %p111 = scmp.ne.s32.totalorder %s103, %s106
      %p112 = scmp.eq.s32.totalorder %s9, 0
      %p113 = por %p111, %p112
      %p114 = scmp.ne.s32.totalorder %s103, %s106
      %p115 = scmp.eq.s32.totalorder %s14, 3
      %p116 = por %p114, %p115
      %p117 = scmp.ne.s32.totalorder %s106, %s107
      %p118 = scmp.eq.s32.totalorder %s14, 0
      %p119 = por %p117, %p118
      %p120 = scmp.ne.s32.totalorder %s106, %s107
      %p121 = scmp.eq.s32.totalorder %s15, 3
      %p122 = por %p120, %p121
      %p124 = scmp.ne.s32.totalorder %s107, %s123
      %p125 = scmp.eq.s32.totalorder %s15, 0
      %p126 = por %p124, %p125
      %p127 = scmp.le.s32.totalorder 1, %s9
      %p128 = scmp.lt.s32.totalorder %s9, 5
      %p129 = pnand %p127, %p128
      %p130 = pneg %p129
      // Predicated region
      $region9: #{conv_block.3} parent=5 // pred_check
        _
      $region10: #{conv_block.3} parent=5 // pred_check_branch
        %132 = sbr.rel (%p129) target = $region12
      $region11: #{conv_block.3} parent=5 // pred_region
        %s133 = ssub.s32 %s9, 1
        // Predicated region
        $region13: #{conv_block.3} parent=11 // pred_check
          %p134 = pneg %p70
        $region14: #{conv_block.3} parent=11 // pred_check_branch
          %136 = sbr.rel (%p134) target = $region16
        $region15: #{conv_block.3} parent=11 // pred_region
          _
        $region16: #{conv_block.3} parent=11 // pred_fallthru
          _
        // Predicated region
        $region17: #{conv_block.3} parent=11 // pred_check
          %p137 = pneg %p91
        $region18: #{conv_block.3} parent=11 // pred_check_branch
          %139 = sbr.rel (%p137) target = $region20
        $region19: #{conv_block.3} parent=11 // pred_region
          _
        $region20: #{conv_block.3} parent=11 // pred_fallthru
          _
      $region12: #{conv_block.3} parent=5 // pred_fallthru
        _
      %p140 = scmp.lt.s32.totalorder %s9, 4
      // Predicated region
      $region21: #{conv_block.3} parent=5 // pred_check
        %p141 = pneg %p140
      $region22: #{conv_block.3} parent=5 // pred_check_branch
        %143 = sbr.rel (%p141) target = $region24
      $region23: #{conv_block.3} parent=5 // pred_region
        // Predicated region
        $region25: #{conv_block.3} parent=23 // pred_check
          %p144 = pneg %p43
        $region26: #{conv_block.3} parent=23 // pred_check_branch
          %146 = sbr.rel (%p144) target = $region28
        $region27: #{conv_block.3} parent=23 // pred_region
          %s147 = smul.u32 16, %s17
          %p148 = scmp.lt.s32.totalorder %s16, 1
          %s149 = scalar_select %p148, %s16, 1
          %p150 = scmp.lt.s32.totalorder %s147, 31
          %s151 = scalar_select %p150, %s147, 31
          %s152 = smul.addr %s149, 32
          %s153 = sadd.s32 %s151, %s152
          %s154 = smul.addr %s153, 4
          %s155 = scalar_lea.vmem %s0, %s154
          %s156 = smul.u32 16, %s17
        $region28: #{conv_block.3} parent=23 // pred_fallthru
          _
      $region24: #{conv_block.3} parent=5 // pred_fallthru
        _
      %p157 = scmp.le.s32.totalorder 1, %s9
      %p158 = scmp.lt.s32.totalorder %s9, 5
      %p159 = pnand %p157, %p158
      %p160 = pneg %p159
      // Predicated region
      $region29: #{conv_block.3} parent=5 // pred_check
        _
      $region30: #{conv_block.3} parent=5 // pred_check_branch
        %162 = sbr.rel (%p159) target = $region32
      $region31: #{conv_block.3} parent=5 // pred_region
        %s163 = ssub.s32 %s9, 1
        %s164 = smul.u32 16, %s19
        %p165 = scmp.lt.s32.totalorder %s18, 1
        %s166 = scalar_select %p165, %s18, 1
        %p167 = scmp.lt.s32.totalorder %s164, 31
        %s168 = scalar_select %p167, %s164, 31
        %s169 = smul.addr %s166, 32
        %s170 = sadd.s32 %s168, %s169
        %s171 = smul.addr %s170, 4
        %s172 = scalar_lea.vmem %s0, %s171
        %p173 = pneg %p49
        %p174 = pneg %p46
        %p175 = pneg %p70
        %p176 = pneg %p67
        %p177 = pneg %p91
        %p178 = pneg %p88
        %p179 = pneg %p119
        %p180 = pneg %p116
        %s181 = sand.u32 %s106, 1
        %s182 = sand.u32 %s106, 1
        %s183 = smul.addr %s182, 128
        %s184 = scalar_lea.vmem [#allocation2], %s183
        %s185 = smul.u32 16, %s19
        %p186 = scmp.lt.s32.totalorder %s18, 1
        %s187 = scalar_select %p186, %s18, 1
        %p188 = scmp.lt.s32.totalorder %s185, 31
        %s189 = scalar_select %p188, %s185, 31
        %s190 = smul.addr %s187, 32
        %s191 = sadd.s32 %s189, %s190
        %s192 = smul.addr %s191, 4
        %s193 = scalar_lea.vmem %s0, %s192
        %s194 = smul.u32 16, %s19
        %v195 = vld [vmem:[%s193] sm:$0xf]
        %v196 = vld [vmem:[%s193 + $0x4] sm:$0xf]
        %v197 = vld [vmem:[%s193 + $0x8] sm:$0xf]
        %v198 = vld [vmem:[%s193 + $0xc] sm:$0xf]
        %v199 = vld [vmem:[%s193 + $0x10] sm:$0xf]
        %v200 = vld [vmem:[%s193 + $0x14] sm:$0xf]
        %v201 = vld [vmem:[%s193 + $0x18] sm:$0xf]
        %v202 = vld [vmem:[%s193 + $0x1c] sm:$0xf]
        %v203 = vld [vmem:[%s193 + $0x20] sm:$0xf]
        %v204 = vld [vmem:[%s193 + $0x24] sm:$0xf]
        %v205 = vld [vmem:[%s193 + $0x28] sm:$0xf]
        %v206 = vld [vmem:[%s193 + $0x2c] sm:$0xf]
        %v207 = vld [vmem:[%s193 + $0x30] sm:$0xf]
        %v208 = vld [vmem:[%s193 + $0x34] sm:$0xf]
        %v209 = vld [vmem:[%s193 + $0x38] sm:$0xf]
        %v210 = vld [vmem:[%s193 + $0x3c] sm:$0xf]
        %v211 = vunpack.c.l.bf16 %v195
        %v212 = vunpack.c.l.bf16 %v196
        %v213 = vunpack.c.l.bf16 %v197
        %v214 = vunpack.c.l.bf16 %v198
        %v215 = vunpack.c.l.bf16 %v199
        %v216 = vunpack.c.l.bf16 %v200
        %v217 = vunpack.c.l.bf16 %v201
        %v218 = vunpack.c.l.bf16 %v202
        %v219 = vunpack.c.l.bf16 %v203
        %v220 = vunpack.c.l.bf16 %v204
        %v221 = vunpack.c.l.bf16 %v205
        %v222 = vunpack.c.l.bf16 %v206
        %v223 = vunpack.c.l.bf16 %v207
        %v224 = vunpack.c.l.bf16 %v208
        %v225 = vunpack.c.l.bf16 %v209
        %v226 = vunpack.c.l.bf16 %v210
        %v227 = vld [vmem:[%s1] sm:$0x1]
        %v229 = vperm.slane %v227, 0
        %v231 = vmul.f32 %v211, %v229
        %v232 = vmul.f32 %v212, %v229
        %v233 = vmul.f32 %v213, %v229
        %v234 = vmul.f32 %v214, %v229
        %v235 = vmul.f32 %v215, %v229
        %v236 = vmul.f32 %v216, %v229
        %v237 = vmul.f32 %v217, %v229
        %v238 = vmul.f32 %v218, %v229
        %v239 = vmul.f32 %v219, %v229
        %v240 = vmul.f32 %v220, %v229
        %v241 = vmul.f32 %v221, %v229
        %v242 = vmul.f32 %v222, %v229
        %v243 = vmul.f32 %v223, %v229
        %v244 = vmul.f32 %v224, %v229
        %v245 = vmul.f32 %v225, %v229
        %v246 = vmul.f32 %v226, %v229
        %v247 = vld [vmem:[%s2] sm:$0x1]
        %v249 = vperm.slane %v247, 0
        %v251 = vadd.f32 %v231, %v249
        %v252 = vadd.f32 %v232, %v249
        %v253 = vadd.f32 %v233, %v249
        %v254 = vadd.f32 %v234, %v249
        %v255 = vadd.f32 %v235, %v249
        %v256 = vadd.f32 %v236, %v249
        %v257 = vadd.f32 %v237, %v249
        %v258 = vadd.f32 %v238, %v249
        %v259 = vadd.f32 %v239, %v249
        %v260 = vadd.f32 %v240, %v249
        %v261 = vadd.f32 %v241, %v249
        %v262 = vadd.f32 %v242, %v249
        %v263 = vadd.f32 %v243, %v249
        %v264 = vadd.f32 %v244, %v249
        %v265 = vadd.f32 %v245, %v249
        %v266 = vadd.f32 %v246, %v249
        %v267 = vmax.f32 %v251, 0.0
        %v268 = vmax.f32 %v252, 0.0
        %v269 = vmax.f32 %v253, 0.0
        %v270 = vmax.f32 %v254, 0.0
        %v271 = vmax.f32 %v255, 0.0
        %v272 = vmax.f32 %v256, 0.0
        %v273 = vmax.f32 %v257, 0.0
        %v274 = vmax.f32 %v258, 0.0
        %v275 = vmax.f32 %v259, 0.0
        %v276 = vmax.f32 %v260, 0.0
        %v277 = vmax.f32 %v261, 0.0
        %v278 = vmax.f32 %v262, 0.0
        %v279 = vmax.f32 %v263, 0.0
        %v280 = vmax.f32 %v264, 0.0
        %v281 = vmax.f32 %v265, 0.0
        %v282 = vmax.f32 %v266, 0.0
        %283 = vxpose.xlu0.b32.start [1/16] %v267, 128
        %284 = vxpose.xlu0.b32.cont [2/16] %v268, 128
        %285 = vxpose.xlu0.b32.cont [3/16] %v269, 128
        %286 = vxpose.xlu0.b32.cont [4/16] %v270, 128
        %287 = vxpose.xlu0.b32.cont [5/16] %v271, 128
        %288 = vxpose.xlu0.b32.cont [6/16] %v272, 128
        %289 = vxpose.xlu0.b32.cont [7/16] %v273, 128
        %290 = vxpose.xlu0.b32.cont [8/16] %v274, 128
        %291 = vxpose.xlu0.b32.cont [9/16] %v275, 128
        %292 = vxpose.xlu0.b32.cont [10/16] %v276, 128
        %293 = vxpose.xlu0.b32.cont [11/16] %v277, 128
        %294 = vxpose.xlu0.b32.cont [12/16] %v278, 128
        %295 = vxpose.xlu0.b32.cont [13/16] %v279, 128
        %296 = vxpose.xlu0.b32.cont [14/16] %v280, 128
        %297 = vxpose.xlu0.b32.cont [15/16] %v281, 128
        %298 = vxpose.xlu0.b32.end [16/16] %v282, 128
        %v299 = vpop.trf.xlu0
        %v300 = vpop.trf.xlu0
        %v301 = vpop.trf.xlu0
        %v302 = vpop.trf.xlu0
        %v303 = vpop.trf.xlu0
        %v304 = vpop.trf.xlu0
        %v305 = vpop.trf.xlu0
        %v306 = vpop.trf.xlu0
        %v307 = vpop.trf.xlu0
        %v308 = vpop.trf.xlu0
        %v309 = vpop.trf.xlu0
        %v310 = vpop.trf.xlu0
        %v311 = vpop.trf.xlu0
        %v312 = vpop.trf.xlu0
        %v313 = vpop.trf.xlu0
        %v314 = vpop.trf.xlu0
        %315 = vst [vmem:[%s184] sm:$0xff] %v299
        %316 = vst [vmem:[%s184 + $0x8] sm:$0xff] %v300
        %317 = vst [vmem:[%s184 + $0x10] sm:$0xff] %v301
        %318 = vst [vmem:[%s184 + $0x18] sm:$0xff] %v302
        %319 = vst [vmem:[%s184 + $0x20] sm:$0xff] %v303
        %320 = vst [vmem:[%s184 + $0x28] sm:$0xff] %v304
        %321 = vst [vmem:[%s184 + $0x30] sm:$0xff] %v305
        %322 = vst [vmem:[%s184 + $0x38] sm:$0xff] %v306
        %323 = vst [vmem:[%s184 + $0x40] sm:$0xff] %v307
        %324 = vst [vmem:[%s184 + $0x48] sm:$0xff] %v308
        %325 = vst [vmem:[%s184 + $0x50] sm:$0xff] %v309
        %326 = vst [vmem:[%s184 + $0x58] sm:$0xff] %v310
        %327 = vst [vmem:[%s184 + $0x60] sm:$0xff] %v311
        %328 = vst [vmem:[%s184 + $0x68] sm:$0xff] %v312
        %329 = vst [vmem:[%s184 + $0x70] sm:$0xff] %v313
        %330 = vst [vmem:[%s184 + $0x78] sm:$0xff] %v314
        %s331 = sand.u32 %s106, 1
        %s332 = sand.u32 %s106, 1
        %s333 = smul.addr %s332, 128
        %s334 = scalar_lea.vmem [#allocation2], %s333
        // Predicated region
        $region33: #{conv_block.3} parent=31 // pred_check
          %p335 = pneg %p116
        $region34: #{conv_block.3} parent=31 // pred_check_branch
          %337 = sbr.rel (%p335) target = $region36
        $region35: #{conv_block.3} parent=31 // pred_region
          %s338 = smul.addr %s18, 32
          %s339 = sadd.s32 %s19, %s338
          %s340 = smul.addr %s339, 8
          %s341 = scalar_lea.vmem %s3, %s340
          // Predicated region
          $region37: #{conv_block.3} parent=35 // pred_check
            _
          $region38: #{conv_block.3} parent=35 // pred_check_branch
            %343 = sbr.rel (0) target = $region40
          $region39: #{conv_block.3} parent=35 // pred_region
            // Predicated region
            $region41: #{conv_block.3} parent=39 // pred_check
              _
            $region42: #{conv_block.3} parent=39 // pred_check_branch
              %345 = sbr.rel (0) target = $region44
            $region43: #{conv_block.3} parent=39 // pred_region
              // Predicated region
              $region56: #{conv_block.3} parent=43 // pred_check
                _
              $region57: #{conv_block.3} parent=43 // pred_check_branch
                %391 = sbr.rel (0) target = $region59
              $region58: #{conv_block.3} parent=43 // pred_region
                loop: start=0, step=1, limit=1
                $region60: #{conv_block.3} parent=58 // loop_pre_header
                  _
                $region61: #{conv_block.3} parent=58 // loop_header
                  %s393 = sphi 0, %s397
                  %p394 = scmp.ge.s32.totalorder %s393, 1
                  %s398 = sphi %s334, %s334
                  %s399 = sphi %s341, %s341
                $region62: #{conv_block.3} parent=58 // loop_header_branch
                  %396 = sbr.rel (%p394) target = $region66
                $region63: #{conv_block.3} parent=58 // loop_body
                  %v400 = vld [vmem:[%s398] sm:$0xff]
                  %401 = vst [vmem:[%s399] sm:$0xff] %v400
                  %v402 = vld [vmem:[%s398 + $0x8] sm:$0xff]
                  %403 = vst [vmem:[%s399 + $0x10] sm:$0xff] %v402
                  %v404 = vld [vmem:[%s398 + $0x10] sm:$0xff]
                  %405 = vst [vmem:[%s399 + $0x20] sm:$0xff] %v404
                  %v406 = vld [vmem:[%s398 + $0x18] sm:$0xff]
                  %407 = vst [vmem:[%s399 + $0x30] sm:$0xff] %v406
                  %v408 = vld [vmem:[%s398 + $0x20] sm:$0xff]
                  %409 = vst [vmem:[%s399 + $0x40] sm:$0xff] %v408
                  %v410 = vld [vmem:[%s398 + $0x28] sm:$0xff]
                  %411 = vst [vmem:[%s399 + $0x50] sm:$0xff] %v410
                  %v412 = vld [vmem:[%s398 + $0x30] sm:$0xff]
                  %413 = vst [vmem:[%s399 + $0x60] sm:$0xff] %v412
                  %v414 = vld [vmem:[%s398 + $0x38] sm:$0xff]
                  %415 = vst [vmem:[%s399 + $0x70] sm:$0xff] %v414
                  %v416 = vld [vmem:[%s398 + $0x40] sm:$0xff]
                  %417 = vst [vmem:[%s399 + $0x80] sm:$0xff] %v416
                  %v418 = vld [vmem:[%s398 + $0x48] sm:$0xff]
                  %419 = vst [vmem:[%s399 + $0x90] sm:$0xff] %v418
                  %v420 = vld [vmem:[%s398 + $0x50] sm:$0xff]
                  %421 = vst [vmem:[%s399 + $0xa0] sm:$0xff] %v420
                  %v422 = vld [vmem:[%s398 + $0x58] sm:$0xff]
                  %423 = vst [vmem:[%s399 + $0xb0] sm:$0xff] %v422
                  %v424 = vld [vmem:[%s398 + $0x60] sm:$0xff]
                  %425 = vst [vmem:[%s399 + $0xc0] sm:$0xff] %v424
                  %v426 = vld [vmem:[%s398 + $0x68] sm:$0xff]
                  %427 = vst [vmem:[%s399 + $0xd0] sm:$0xff] %v426
                  %v428 = vld [vmem:[%s398 + $0x70] sm:$0xff]
                  %429 = vst [vmem:[%s399 + $0xe0] sm:$0xff] %v428
                  %v430 = vld [vmem:[%s398 + $0x78] sm:$0xff]
                  %431 = vst [vmem:[%s399 + $0xf0] sm:$0xff] %v430
                $region64: #{conv_block.3} parent=58 // loop_footer
                  %s397 = sadd.s32 1, %s393
                $region65: #{conv_block.3} parent=58 // loop_footer_branch
                  %392 = sbr.rel target = $region61
                $region66: #{conv_block.3} parent=58 // loop_exit
                  _
              $region59: #{conv_block.3} parent=43 // pred_fallthru
                _
              // Predicated region
              $region67: #{conv_block.3} parent=43 // pred_check
                _
              $region68: #{conv_block.3} parent=43 // pred_check_branch
                %433 = sbr.rel target = $region70
              $region69: #{conv_block.3} parent=43 // pred_region
                _
              $region70: #{conv_block.3} parent=43 // pred_fallthru
                _
            $region44: #{conv_block.3} parent=39 // pred_fallthru
              _
            // Predicated region
            $region45: #{conv_block.3} parent=39 // pred_check
              _
            $region46: #{conv_block.3} parent=39 // pred_check_branch
              %347 = sbr.rel target = $region48
            $region47: #{conv_block.3} parent=39 // pred_region
              %s349 = ssub.s32 256, 1
              loop: start=0, step=1, limit=1
              $region49: #{conv_block.3} parent=47 // loop_pre_header
                _
              $region50: #{conv_block.3} parent=47 // loop_header
                %s351 = sphi 0, %s355
                %p352 = scmp.ge.s32.totalorder %s351, 1
                %s356 = sphi %s334, %s334
                %s357 = sphi %s341, %s341
              $region51: #{conv_block.3} parent=47 // loop_header_branch
                %354 = sbr.rel (%p352) target = $region55
              $region52: #{conv_block.3} parent=47 // loop_body
                %v358 = vld [vmem:[%s356] sm:%s349]
                %359 = vst [vmem:[%s357] sm:%s349] %v358
                %v360 = vld [vmem:[%s356 + $0x8] sm:%s349]
                %361 = vst [vmem:[%s357 + $0x10] sm:%s349] %v360
                %v362 = vld [vmem:[%s356 + $0x10] sm:%s349]
                %363 = vst [vmem:[%s357 + $0x20] sm:%s349] %v362
                %v364 = vld [vmem:[%s356 + $0x18] sm:%s349]
                %365 = vst [vmem:[%s357 + $0x30] sm:%s349] %v364
                %v366 = vld [vmem:[%s356 + $0x20] sm:%s349]
                %367 = vst [vmem:[%s357 + $0x40] sm:%s349] %v366
                %v368 = vld [vmem:[%s356 + $0x28] sm:%s349]
                %369 = vst [vmem:[%s357 + $0x50] sm:%s349] %v368
                %v370 = vld [vmem:[%s356 + $0x30] sm:%s349]
                %371 = vst [vmem:[%s357 + $0x60] sm:%s349] %v370
                %v372 = vld [vmem:[%s356 + $0x38] sm:%s349]
                %373 = vst [vmem:[%s357 + $0x70] sm:%s349] %v372
                %v374 = vld [vmem:[%s356 + $0x40] sm:%s349]
                %375 = vst [vmem:[%s357 + $0x80] sm:%s349] %v374
                %v376 = vld [vmem:[%s356 + $0x48] sm:%s349]
                %377 = vst [vmem:[%s357 + $0x90] sm:%s349] %v376
                %v378 = vld [vmem:[%s356 + $0x50] sm:%s349]
                %379 = vst [vmem:[%s357 + $0xa0] sm:%s349] %v378
                %v380 = vld [vmem:[%s356 + $0x58] sm:%s349]
                %381 = vst [vmem:[%s357 + $0xb0] sm:%s349] %v380
                %v382 = vld [vmem:[%s356 + $0x60] sm:%s349]
                %383 = vst [vmem:[%s357 + $0xc0] sm:%s349] %v382
                %v384 = vld [vmem:[%s356 + $0x68] sm:%s349]
                %385 = vst [vmem:[%s357 + $0xd0] sm:%s349] %v384
                %v386 = vld [vmem:[%s356 + $0x70] sm:%s349]
                %387 = vst [vmem:[%s357 + $0xe0] sm:%s349] %v386
                %v388 = vld [vmem:[%s356 + $0x78] sm:%s349]
                %389 = vst [vmem:[%s357 + $0xf0] sm:%s349] %v388
              $region53: #{conv_block.3} parent=47 // loop_footer
                %s355 = sadd.s32 1, %s351
              $region54: #{conv_block.3} parent=47 // loop_footer_branch
                %350 = sbr.rel target = $region50
              $region55: #{conv_block.3} parent=47 // loop_exit
                _
            $region48: #{conv_block.3} parent=39 // pred_fallthru
              _
          $region40: #{conv_block.3} parent=35 // pred_fallthru
            _
          %434 = vnop
        $region36: #{conv_block.3} parent=31 // pred_fallthru
          _
      $region32: #{conv_block.3} parent=5 // pred_fallthru
        _
      %p435 = scmp.le.s32.totalorder 2, %s9
      // Predicated region
      $region71: #{conv_block.3} parent=5 // pred_check
        %p436 = pneg %p435
      $region72: #{conv_block.3} parent=5 // pred_check_branch
        %438 = sbr.rel (%p436) target = $region74
      $region73: #{conv_block.3} parent=5 // pred_region
        %s439 = ssub.s32 %s9, 2
        // Predicated region
        $region75: #{conv_block.3} parent=73 // pred_check
          %p440 = pneg %p122
        $region76: #{conv_block.3} parent=73 // pred_check_branch
          %442 = sbr.rel (%p440) target = $region78
        $region77: #{conv_block.3} parent=73 // pred_region
          %s443 = sand.u32 %s107, 1
          %s444 = sand.u32 %s107, 1
          %s445 = smul.addr %s444, 128
          %s446 = scalar_lea.vmem [#allocation2], %s445
        $region78: #{conv_block.3} parent=73 // pred_fallthru
          _
      $region74: #{conv_block.3} parent=5 // pred_fallthru
        _
    $region6: #{conv_block.3} parent=1 // loop_footer
      %s13 = sadd.s32 1, %s9
    $region7: #{conv_block.3} parent=1 // loop_footer_branch
      %8 = sbr.rel target = $region3
    $region8: #{conv_block.3} parent=1 // loop_exit
      _

// kernel: conv_block.2
$region0: #{conv_block.2}
  #allocation0 [shape = 'u32[]', space=smem, size = 0x4, offset = 0x4, fixed_abs, tag = 'smem constant byte address 0x4 - core index']
  #allocation1 [shape = 'u32[72,128]{1,0:T(1,128)}', space=vmem, size = 0x9000, scoped, tag = 'internal scratch']
  #allocation2 [shape = 'f32[128,128]{1,0:T(8,128)}', space=vmem, size = 0x10000, scoped, tag = 'scratch operand']
  %s0 = inlined_call_operand.vmem [shape: bf16[2,256,128], index: 0, kind: input, shape index: {}]
  %s1 = inlined_call_operand.vmem [shape: bf16[128,128], index: 1, kind: input, shape index: {}]
  %s2 = inlined_call_operand.vmem [shape: bf16[2,256,128], index: 2, kind: output, shape index: {0}]
  %s3 = inlined_call_operand.vmem [shape: f32[32,128], index: 3, kind: output, shape index: {1}]
  %4 = xla_tuple %s2, %s3
  %s5 = sld [smem:[#allocation0]]
  $region57: #{conv_block.2} parent=0
    _
  %s7 = ssub.s32 1, %s5
  %s8 = scalar_select 0, %s7, %s5
  loop: start=0, step=1, limit=6
  $region2: #{conv_block.2} parent=0 // loop_pre_header
    _
  $region3: #{conv_block.2} parent=0 // loop_header
    %s10 = sphi 0, %s14
    %p11 = scmp.ge.s32.totalorder %s10, 6
    %s17 = sphi 0, %s36
    %s18 = sphi 0, %s32
    %s19 = sphi 0, %s28
    %s20 = sphi 0, %s17
    %s21 = sphi 0, %s18
    %s22 = sphi 0, %s19
    %s23 = sphi 0, %s20
    %s24 = sphi 0, %s21
    %s25 = sphi 0, %s22
    %s43 = sphi 0, %s45
    %s46 = sphi 0, %s43
    %s47 = sphi 0, %s46
    %s63 = sphi 0, %s47
    %s69 = sphi 0, %s71
    %s72 = sphi 0, %s69
    %s73 = sphi 0, %s72
    %s89 = sphi 0, %s73
    %s97 = sphi 0, %s99
    %s100 = sphi 0, %s97
    %s101 = sphi 0, %s100
    %s117 = sphi 0, %s101
    %s127 = sphi 0, %s129
    %s130 = sphi 0, %s127
    %s131 = sphi 0, %s130
    %s147 = sphi 0, %s131
  $region4: #{conv_block.2} parent=0 // loop_header_branch
    %13 = sbr.rel (%p11) target = $region8
  $region5: #{conv_block.2} parent=0 // loop_body
    %s15 = ssub.s32 %s10, 1
    %s16 = ssub.s32 %s10, 2
    %s26 = sadd.s32 1, %s19
    %p27 = scmp.ge.s32.totalorder %s26, 1
    %s28 = scalar_select %p27, 0, %s26
    %s29 = sadd.s32 1, %s18
    %s30 = scalar_select %p27, %s29, %s18
    %p31 = scmp.ge.s32.totalorder %s30, 2
    %s32 = scalar_select %p31, 0, %s30
    %s33 = sadd.s32 1, %s17
    %s34 = scalar_select %p31, %s33, %s17
    %p35 = scmp.ge.s32.totalorder %s34, 2
    %s36 = scalar_select %p35, 0, %s34
    %s37 = ssub.s32 %s17, %s36
    %s38 = ssub.s32 %s18, %s32
    %s39 = sor.u32 %s37, %s38
    %s40 = ssub.s32 %s19, %s28
    %s41 = sor.u32 %s39, %s40
    %p42 = scmp.eq.s32.totalorder %s41, 0
    %s44 = sadd.s32 %s43, 1
    %s45 = scalar_select %p42, %s43, %s44
    %p48 = pneg %p42
    %p49 = scmp.eq.s32.totalorder %s10, 3
    %p50 = por %p48, %p49
    %p51 = scmp.ne.s32.totalorder %s43, %s46
    %p52 = scmp.eq.s32.totalorder %s10, 0
    %p53 = por %p51, %p52
    %p54 = scmp.ne.s32.totalorder %s43, %s46
    %p55 = scmp.eq.s32.totalorder %s15, 3
    %p56 = por %p54, %p55
    %p57 = scmp.ne.s32.totalorder %s46, %s47
    %p58 = scmp.eq.s32.totalorder %s15, 0
    %p59 = por %p57, %p58
    %p60 = scmp.ne.s32.totalorder %s46, %s47
    %p61 = scmp.eq.s32.totalorder %s16, 3
    %p62 = por %p60, %p61
    %p64 = scmp.ne.s32.totalorder %s47, %s63
    %p65 = scmp.eq.s32.totalorder %s16, 0
    %p66 = por %p64, %p65
    %s67 = ssub.s32 %s19, %s28
    %p68 = scmp.eq.s32.totalorder %s67, 0
    %s70 = sadd.s32 %s69, 1
    %s71 = scalar_select %p68, %s69, %s70
    %p74 = pneg %p68
    %p75 = scmp.eq.s32.totalorder %s10, 3
    %p76 = por %p74, %p75
    %p77 = scmp.ne.s32.totalorder %s69, %s72
    %p78 = scmp.eq.s32.totalorder %s10, 0
    %p79 = por %p77, %p78
    %p80 = scmp.ne.s32.totalorder %s69, %s72
    %p81 = scmp.eq.s32.totalorder %s15, 3
    %p82 = por %p80, %p81
    %p83 = scmp.ne.s32.totalorder %s72, %s73
    %p84 = scmp.eq.s32.totalorder %s15, 0
    %p85 = por %p83, %p84
    %p86 = scmp.ne.s32.totalorder %s72, %s73
    %p87 = scmp.eq.s32.totalorder %s16, 3
    %p88 = por %p86, %p87
    %p90 = scmp.ne.s32.totalorder %s73, %s89
    %p91 = scmp.eq.s32.totalorder %s16, 0
    %p92 = por %p90, %p91
    %s93 = ssub.s32 %s17, %s36
    %s94 = ssub.s32 %s18, %s32
    %s95 = sor.u32 %s93, %s94
    %p96 = scmp.eq.s32.totalorder %s95, 0
    %s98 = sadd.s32 %s97, 1
    %s99 = scalar_select %p96, %s97, %s98
    %p102 = pneg %p96
    %p103 = scmp.eq.s32.totalorder %s10, 3
    %p104 = por %p102, %p103
    %p105 = scmp.ne.s32.totalorder %s97, %s100
    %p106 = scmp.eq.s32.totalorder %s10, 0
    %p107 = por %p105, %p106
    %p108 = scmp.ne.s32.totalorder %s97, %s100
    %p109 = scmp.eq.s32.totalorder %s15, 3
    %p110 = por %p108, %p109
    %p111 = scmp.ne.s32.totalorder %s100, %s101
    %p112 = scmp.eq.s32.totalorder %s15, 0
    %p113 = por %p111, %p112
    %p114 = scmp.ne.s32.totalorder %s100, %s101
    %p115 = scmp.eq.s32.totalorder %s16, 3
    %p116 = por %p114, %p115
    %p118 = scmp.ne.s32.totalorder %s101, %s117
    %p119 = scmp.eq.s32.totalorder %s16, 0
    %p120 = por %p118, %p119
    %s121 = smul.u32 %s17, 2
    %s122 = sadd.s32 %s121, %s18
    %s123 = smul.u32 %s36, 2
    %s124 = sadd.s32 %s123, %s32
    %s125 = ssub.s32 %s122, %s124
    %p126 = scmp.eq.s32.totalorder %s125, 0
    %s128 = sadd.s32 %s127, 1
    %s129 = scalar_select %p126, %s127, %s128
    %p132 = pneg %p126
    %p133 = scmp.eq.s32.totalorder %s10, 3
    %p134 = por %p132, %p133
    %p135 = scmp.ne.s32.totalorder %s127, %s130
    %p136 = scmp.eq.s32.totalorder %s10, 0
    %p137 = por %p135, %p136
    %p138 = scmp.ne.s32.totalorder %s127, %s130
    %p139 = scmp.eq.s32.totalorder %s15, 3
    %p140 = por %p138, %p139
    %p141 = scmp.ne.s32.totalorder %s130, %s131
    %p142 = scmp.eq.s32.totalorder %s15, 0
    %p143 = por %p141, %p142
    %p144 = scmp.ne.s32.totalorder %s130, %s131
    %p145 = scmp.eq.s32.totalorder %s16, 3
    %p146 = por %p144, %p145
    %p148 = scmp.ne.s32.totalorder %s131, %s147
    %p149 = scmp.eq.s32.totalorder %s16, 0
    %p150 = por %p148, %p149
    %p151 = scmp.le.s32.totalorder 1, %s10
    %p152 = scmp.lt.s32.totalorder %s10, 5
    %p153 = pnand %p151, %p152
    %p154 = pneg %p153
    // Predicated region
    $region9: #{conv_block.2} parent=5 // pred_check
      _
    $region10: #{conv_block.2} parent=5 // pred_check_branch
      %156 = sbr.rel (%p153) target = $region12
    $region11: #{conv_block.2} parent=5 // pred_region
      %s157 = ssub.s32 %s10, 1
      // Predicated region
      $region13: #{conv_block.2} parent=11 // pred_check
        %p158 = pneg %p85
      $region14: #{conv_block.2} parent=11 // pred_check_branch
        %160 = sbr.rel (%p158) target = $region16
      $region15: #{conv_block.2} parent=11 // pred_region
        %s161 = smul.u32 16, %s22
        %p162 = scmp.lt.s32.totalorder %s161, 15
        %s163 = scalar_select %p162, %s161, 15
        %s164 = smul.addr %s163, 4
        %s165 = scalar_lea.vmem %s1, %s164
        %s166 = smul.u32 16, %s22
      $region16: #{conv_block.2} parent=11 // pred_fallthru
        _
    $region12: #{conv_block.2} parent=5 // pred_fallthru
      _
    %p167 = scmp.lt.s32.totalorder %s10, 4
    // Predicated region
    $region17: #{conv_block.2} parent=5 // pred_check
      %p168 = pneg %p167
    $region18: #{conv_block.2} parent=5 // pred_check_branch
      %170 = sbr.rel (%p168) target = $region20
    $region19: #{conv_block.2} parent=5 // pred_region
      // Predicated region
      $region21: #{conv_block.2} parent=19 // pred_check
        %p171 = pneg %p53
      $region22: #{conv_block.2} parent=19 // pred_check_branch
        %173 = sbr.rel (%p171) target = $region24
      $region23: #{conv_block.2} parent=19 // pred_region
        %s174 = smul.u32 16, %s18
        %p175 = scmp.lt.s32.totalorder %s17, 1
        %s176 = scalar_select %p175, %s17, 1
        %p177 = scmp.lt.s32.totalorder %s174, 31
        %s178 = scalar_select %p177, %s174, 31
        %p179 = scmp.lt.s32.totalorder %s19, 0
        %s180 = scalar_select %p179, %s19, 0
        %s181 = sadd.s32 %s180, %s178
        %s182 = smul.addr %s176, 32
        %s183 = sadd.s32 %s181, %s182
        %s184 = smul.addr %s183, 4
        %s185 = scalar_lea.vmem %s0, %s184
        %s186 = smul.u32 16, %s18
      $region24: #{conv_block.2} parent=19 // pred_fallthru
        _
    $region20: #{conv_block.2} parent=5 // pred_fallthru
      _
    %p187 = scmp.le.s32.totalorder 1, %s10
    %p188 = scmp.lt.s32.totalorder %s10, 5
    %p189 = pnand %p187, %p188
    %p190 = pneg %p189
    // Predicated region
    $region25: #{conv_block.2} parent=5 // pred_check
      _
    $region26: #{conv_block.2} parent=5 // pred_check_branch
      %192 = sbr.rel (%p189) target = $region28
    $region27: #{conv_block.2} parent=5 // pred_region
      %s193 = ssub.s32 %s10, 1
      %s194 = smul.u32 16, %s21
      %p195 = scmp.lt.s32.totalorder %s20, 1
      %s196 = scalar_select %p195, %s20, 1
      %p197 = scmp.lt.s32.totalorder %s194, 31
      %s198 = scalar_select %p197, %s194, 31
      %p199 = scmp.lt.s32.totalorder %s22, 0
      %s200 = scalar_select %p199, %s22, 0
      %s201 = sadd.s32 %s200, %s198
      %s202 = smul.addr %s196, 32
      %s203 = sadd.s32 %s201, %s202
      %s204 = smul.addr %s203, 4
      %s205 = scalar_lea.vmem %s0, %s204
      %p206 = pneg %p59
      %p207 = pneg %p56
      %s208 = smul.u32 16, %s22
      %p209 = scmp.lt.s32.totalorder %s208, 15
      %s210 = scalar_select %p209, %s208, 15
      %s211 = smul.addr %s210, 4
      %s212 = scalar_lea.vmem %s1, %s211
      %p213 = pneg %p85
      %p214 = pneg %p82
      %p215 = pneg %p113
      %p216 = pneg %p110
      %s217 = smul.u32 16, %s21
      %p218 = scmp.lt.s32.totalorder %s20, 1
      %s219 = scalar_select %p218, %s20, 1
      %p220 = scmp.lt.s32.totalorder %s217, 31
      %s221 = scalar_select %p220, %s217, 31
      %s222 = smul.addr %s219, 32
      %s223 = sadd.s32 %s221, %s222
      %s224 = smul.addr %s223, 4
      %s225 = scalar_lea.vmem %s2, %s224
      %p226 = pneg %p143
      %p227 = pneg %p140
      %s228 = smul.u32 %s20, 2
      %s229 = sadd.s32 %s228, %s21
      %p230 = scmp.lt.s32.totalorder %s229, 3
      %s231 = scalar_select %p230, %s229, 3
      %s232 = smul.addr %s231, 8
      %s233 = scalar_lea.vmem %s3, %s232
      %s234 = smul.u32 16, %s21
      %p235 = scmp.lt.s32.totalorder %s20, 1
      %s236 = scalar_select %p235, %s20, 1
      %p237 = scmp.lt.s32.totalorder %s234, 31
      %s238 = scalar_select %p237, %s234, 31
      %p239 = scmp.lt.s32.totalorder %s22, 0
      %s240 = scalar_select %p239, %s22, 0
      %s241 = sadd.s32 %s240, %s238
      %s242 = smul.addr %s236, 32
      %s243 = sadd.s32 %s241, %s242
      %s244 = smul.addr %s243, 4
      %s245 = scalar_lea.vmem %s0, %s244
      %s246 = smul.u32 16, %s21
      %s247 = smul.u32 16, %s22
      %p248 = scmp.lt.s32.totalorder %s247, 15
      %s249 = scalar_select %p248, %s247, 15
      %s250 = smul.addr %s249, 4
      %s251 = scalar_lea.vmem %s1, %s250
      %s252 = smul.u32 16, %s22
      %s253 = smul.u32 16, %s21
      %p254 = scmp.lt.s32.totalorder %s20, 1
      %s255 = scalar_select %p254, %s20, 1
      %p256 = scmp.lt.s32.totalorder %s253, 31
      %s257 = scalar_select %p256, %s253, 31
      %s258 = smul.addr %s255, 32
      %s259 = sadd.s32 %s257, %s258
      %s260 = smul.addr %s259, 4
      %s261 = scalar_lea.vmem %s2, %s260
      %s262 = smul.u32 16, %s21
      %s263 = smul.u32 %s20, 2
      %s264 = sadd.s32 %s263, %s21
      %p265 = scmp.lt.s32.totalorder %s264, 3
      %s266 = scalar_select %p265, %s264, 3
      %s267 = smul.addr %s266, 8
      %s268 = scalar_lea.vmem %s3, %s267
      %s269 = smul.u32 %s20, 2
      %s270 = sadd.s32 %s269, %s21
      %p271 = scmp.eq.s32.totalorder %s22, 0
      // Predicated region
      $region29: #{conv_block.2} parent=27 // pred_check
        %p272 = pneg %p271
      $region30: #{conv_block.2} parent=27 // pred_check_branch
        %274 = sbr.rel (%p272) target = $region32
      $region31: #{conv_block.2} parent=27 // pred_region
        %275 = vst [vmem:[#allocation2] sm:$0xff] 0.0
        %276 = vst [vmem:[#allocation2 + $0x8] sm:$0xff] 0.0
        %277 = vst [vmem:[#allocation2 + $0x10] sm:$0xff] 0.0
        %278 = vst [vmem:[#allocation2 + $0x18] sm:$0xff] 0.0
        %279 = vst [vmem:[#allocation2 + $0x20] sm:$0xff] 0.0
        %280 = vst [vmem:[#allocation2 + $0x28] sm:$0xff] 0.0
        %281 = vst [vmem:[#allocation2 + $0x30] sm:$0xff] 0.0
        %282 = vst [vmem:[#allocation2 + $0x38] sm:$0xff] 0.0
        %283 = vst [vmem:[#allocation2 + $0x40] sm:$0xff] 0.0
        %284 = vst [vmem:[#allocation2 + $0x48] sm:$0xff] 0.0
        %285 = vst [vmem:[#allocation2 + $0x50] sm:$0xff] 0.0
        %286 = vst [vmem:[#allocation2 + $0x58] sm:$0xff] 0.0
        %287 = vst [vmem:[#allocation2 + $0x60] sm:$0xff] 0.0
        %288 = vst [vmem:[#allocation2 + $0x68] sm:$0xff] 0.0
        %289 = vst [vmem:[#allocation2 + $0x70] sm:$0xff] 0.0
        %290 = vst [vmem:[#allocation2 + $0x78] sm:$0xff] 0.0
      $region32: #{conv_block.2} parent=27 // pred_fallthru
        _
      %v291 = vld [vmem:[#allocation2] sm:$0xff]
      %v292 = vld [vmem:[#allocation2 + $0x8] sm:$0xff]
      %v293 = vld [vmem:[#allocation2 + $0x10] sm:$0xff]
      %v294 = vld [vmem:[#allocation2 + $0x18] sm:$0xff]
      %v295 = vld [vmem:[#allocation2 + $0x20] sm:$0xff]
      %v296 = vld [vmem:[#allocation2 + $0x28] sm:$0xff]
      %v297 = vld [vmem:[#allocation2 + $0x30] sm:$0xff]
      %v298 = vld [vmem:[#allocation2 + $0x38] sm:$0xff]
      %v299 = vld [vmem:[#allocation2 + $0x40] sm:$0xff]
      %v300 = vld [vmem:[#allocation2 + $0x48] sm:$0xff]
      %v301 = vld [vmem:[#allocation2 + $0x50] sm:$0xff]
      %v302 = vld [vmem:[#allocation2 + $0x58] sm:$0xff]
      %v303 = vld [vmem:[#allocation2 + $0x60] sm:$0xff]
      %v304 = vld [vmem:[#allocation2 + $0x68] sm:$0xff]
      %v305 = vld [vmem:[#allocation2 + $0x70] sm:$0xff]
      %v306 = vld [vmem:[#allocation2 + $0x78] sm:$0xff]
      %v307 = vld [vmem:[%s245] sm:$0xf]
      %v308 = vld [vmem:[%s245 + $0x4] sm:$0xf]
      %v309 = vld [vmem:[%s245 + $0x8] sm:$0xf]
      %v310 = vld [vmem:[%s245 + $0xc] sm:$0xf]
      %v311 = vld [vmem:[%s245 + $0x10] sm:$0xf]
      %v312 = vld [vmem:[%s245 + $0x14] sm:$0xf]
      %v313 = vld [vmem:[%s245 + $0x18] sm:$0xf]
      %v314 = vld [vmem:[%s245 + $0x1c] sm:$0xf]
      %v315 = vld [vmem:[%s245 + $0x20] sm:$0xf]
      %v316 = vld [vmem:[%s245 + $0x24] sm:$0xf]
      %v317 = vld [vmem:[%s245 + $0x28] sm:$0xf]
      %v318 = vld [vmem:[%s245 + $0x2c] sm:$0xf]
      %v319 = vld [vmem:[%s245 + $0x30] sm:$0xf]
      %v320 = vld [vmem:[%s245 + $0x34] sm:$0xf]
      %v321 = vld [vmem:[%s245 + $0x38] sm:$0xf]
      %v322 = vld [vmem:[%s245 + $0x3c] sm:$0xf]
      %v323 = vld [vmem:[%s251] sm:$0xf]
      %v324 = vld [vmem:[%s251 + $0x4] sm:$0xf]
      %v325 = vld [vmem:[%s251 + $0x8] sm:$0xf]
      %v326 = vld [vmem:[%s251 + $0xc] sm:$0xf]
      %v327 = vld [vmem:[%s251 + $0x10] sm:$0xf]
      %v328 = vld [vmem:[%s251 + $0x14] sm:$0xf]
      %v329 = vld [vmem:[%s251 + $0x18] sm:$0xf]
      %v330 = vld [vmem:[%s251 + $0x1c] sm:$0xf]
      %v331 = vld [vmem:[%s251 + $0x20] sm:$0xf]
      %v332 = vld [vmem:[%s251 + $0x24] sm:$0xf]
      %v333 = vld [vmem:[%s251 + $0x28] sm:$0xf]
      %v334 = vld [vmem:[%s251 + $0x2c] sm:$0xf]
      %v335 = vld [vmem:[%s251 + $0x30] sm:$0xf]
      %v336 = vld [vmem:[%s251 + $0x34] sm:$0xf]
      %v337 = vld [vmem:[%s251 + $0x38] sm:$0xf]
      %v338 = vld [vmem:[%s251 + $0x3c] sm:$0xf]
      %v355 = vunpack.c.l.b16 %v307
      %v356 = vunpack.c.l.b16 %v308
      %v357 = vunpack.c.l.b16 %v309
      %v358 = vunpack.c.l.b16 %v310
      %v359 = vunpack.c.l.b16 %v311
      %v360 = vunpack.c.l.b16 %v312
      %v361 = vunpack.c.l.b16 %v313
      %v362 = vunpack.c.l.b16 %v314
      %v363 = vunpack.c.l.b16 %v315
      %v364 = vunpack.c.l.b16 %v316
      %v365 = vunpack.c.l.b16 %v317
      %v366 = vunpack.c.l.b16 %v318
      %v367 = vunpack.c.l.b16 %v319
      %v368 = vunpack.c.l.b16 %v320
      %v369 = vunpack.c.l.b16 %v321
      %v370 = vunpack.c.l.b16 %v322
      %v371 = vpack.c.b16 %v356, %v355
      %v372 = vpack.c.b16 %v358, %v357
      %v373 = vpack.c.b16 %v360, %v359
      %v374 = vpack.c.b16 %v362, %v361
      %v375 = vpack.c.b16 %v364, %v363
      %v376 = vpack.c.b16 %v366, %v365
      %v377 = vpack.c.b16 %v368, %v367
      %v378 = vpack.c.b16 %v370, %v369
      %v403 = vunpack.c.l.b16 %v323
      %v404 = vunpack.c.l.b16 %v324
      %v405 = vunpack.c.l.b16 %v325
      %v406 = vunpack.c.l.b16 %v326
      %v407 = vunpack.c.l.b16 %v327
      %v408 = vunpack.c.l.b16 %v328
      %v409 = vunpack.c.l.b16 %v329
      %v410 = vunpack.c.l.b16 %v330
      %v411 = vunpack.c.l.b16 %v331
      %v412 = vunpack.c.l.b16 %v332
      %v413 = vunpack.c.l.b16 %v333
      %v414 = vunpack.c.l.b16 %v334
      %v415 = vunpack.c.l.b16 %v335
      %v416 = vunpack.c.l.b16 %v336
      %v417 = vunpack.c.l.b16 %v337
      %v418 = vunpack.c.l.b16 %v338
      %v419 = vpack.c.b16 %v404, %v403
      %v420 = vpack.c.b16 %v406, %v405
      %v421 = vpack.c.b16 %v408, %v407
      %v422 = vpack.c.b16 %v410, %v409
      %v423 = vpack.c.b16 %v412, %v411
      %v424 = vpack.c.b16 %v414, %v413
      %v425 = vpack.c.b16 %v416, %v415
      %v426 = vpack.c.b16 %v418, %v417
      %435 = vmatpush.bf16.msra.mxu0 %v426
      %436 = vmatpush.bf16.msra.mxu0 %v425
      %437 = vmatpush.bf16.msra.mxu0 %v424
      %438 = vmatpush.bf16.msra.mxu0 %v423
      %439 = vmatpush.bf16.msra.mxu0 %v422
      %440 = vmatpush.bf16.msra.mxu0 %v421
      %441 = vmatpush.bf16.msra.mxu0 %v420
      %442 = vmatpush.bf16.msra.mxu0 %v419
      %443 = vmatmul.bf16.gmra.mxu0 %v371
      %v444 = vpop.f32.mrf.mxu0
      %v445 = vadd.f32 0.0, %v444
      %v446 = vpop.f32.mrf.mxu0
      %v447 = vadd.f32 0.0, %v446
      %448 = vmatmul.bf16.gmra.mxu0 %v372
      %v449 = vpop.f32.mrf.mxu0
      %v450 = vadd.f32 0.0, %v449
      %v451 = vpop.f32.mrf.mxu0
      %v452 = vadd.f32 0.0, %v451
      %453 = vmatmul.bf16.gmra.mxu0 %v373
      %v454 = vpop.f32.mrf.mxu0
      %v455 = vadd.f32 0.0, %v454
      %v456 = vpop.f32.mrf.mxu0
      %v457 = vadd.f32 0.0, %v456
      %458 = vmatmul.bf16.gmra.mxu0 %v374
      %v459 = vpop.f32.mrf.mxu0
      %v460 = vadd.f32 0.0, %v459
      %v461 = vpop.f32.mrf.mxu0
      %v462 = vadd.f32 0.0, %v461
      %463 = vmatmul.bf16.gmra.mxu0 %v375
      %v464 = vpop.f32.mrf.mxu0
      %v465 = vadd.f32 0.0, %v464
      %v466 = vpop.f32.mrf.mxu0
      %v467 = vadd.f32 0.0, %v466
      %468 = vmatmul.bf16.gmra.mxu0 %v376
      %v469 = vpop.f32.mrf.mxu0
      %v470 = vadd.f32 0.0, %v469
      %v471 = vpop.f32.mrf.mxu0
      %v472 = vadd.f32 0.0, %v471
      %473 = vmatmul.bf16.gmra.mxu0 %v377
      %v474 = vpop.f32.mrf.mxu0
      %v475 = vadd.f32 0.0, %v474
      %v476 = vpop.f32.mrf.mxu0
      %v477 = vadd.f32 0.0, %v476
      %478 = vmatmul.bf16.gmra.mxu0 %v378
      %v479 = vpop.f32.mrf.mxu0
      %v480 = vadd.f32 0.0, %v479
      %v481 = vpop.f32.mrf.mxu0
      %v482 = vadd.f32 0.0, %v481
      %483 = vdwg.mxu0
      %v484 = vadd.f32 %v291, %v445
      %v485 = vadd.f32 %v292, %v447
      %v486 = vadd.f32 %v293, %v450
      %v487 = vadd.f32 %v294, %v452
      %v488 = vadd.f32 %v295, %v455
      %v489 = vadd.f32 %v296, %v457
      %v490 = vadd.f32 %v297, %v460
      %v491 = vadd.f32 %v298, %v462
      %v492 = vadd.f32 %v299, %v465
      %v493 = vadd.f32 %v300, %v467
      %v494 = vadd.f32 %v301, %v470
      %v495 = vadd.f32 %v302, %v472
      %v496 = vadd.f32 %v303, %v475
      %v497 = vadd.f32 %v304, %v477
      %v498 = vadd.f32 %v305, %v480
      %v499 = vadd.f32 %v306, %v482
      %500 = vst [vmem:[#allocation2] sm:$0xff] %v484
      %501 = vst [vmem:[#allocation2 + $0x8] sm:$0xff] %v485
      %502 = vst [vmem:[#allocation2 + $0x10] sm:$0xff] %v486
      %503 = vst [vmem:[#allocation2 + $0x18] sm:$0xff] %v487
      %504 = vst [vmem:[#allocation2 + $0x20] sm:$0xff] %v488
      %505 = vst [vmem:[#allocation2 + $0x28] sm:$0xff] %v489
      %506 = vst [vmem:[#allocation2 + $0x30] sm:$0xff] %v490
      %507 = vst [vmem:[#allocation2 + $0x38] sm:$0xff] %v491
      %508 = vst [vmem:[#allocation2 + $0x40] sm:$0xff] %v492
      %509 = vst [vmem:[#allocation2 + $0x48] sm:$0xff] %v493
      %510 = vst [vmem:[#allocation2 + $0x50] sm:$0xff] %v494
      %511 = vst [vmem:[#allocation2 + $0x58] sm:$0xff] %v495
      %512 = vst [vmem:[#allocation2 + $0x60] sm:$0xff] %v496
      %513 = vst [vmem:[#allocation2 + $0x68] sm:$0xff] %v497
      %514 = vst [vmem:[#allocation2 + $0x70] sm:$0xff] %v498
      %515 = vst [vmem:[#allocation2 + $0x78] sm:$0xff] %v499
      // Predicated region
      $region33: #{conv_block.2} parent=27 // pred_check
        %p516 = pneg %p271
      $region34: #{conv_block.2} parent=27 // pred_check_branch
        %518 = sbr.rel (%p516) target = $region36
      $region35: #{conv_block.2} parent=27 // pred_region
        %v519 = vld [vmem:[#allocation2] sm:$0xff]
        %v520 = vld [vmem:[#allocation2 + $0x8] sm:$0xff]
        %v521 = vld [vmem:[#allocation2 + $0x10] sm:$0xff]
        %v522 = vld [vmem:[#allocation2 + $0x18] sm:$0xff]
        %v523 = vld [vmem:[#allocation2 + $0x20] sm:$0xff]
        %v524 = vld [vmem:[#allocation2 + $0x28] sm:$0xff]
        %v525 = vld [vmem:[#allocation2 + $0x30] sm:$0xff]
        %v526 = vld [vmem:[#allocation2 + $0x38] sm:$0xff]
        %v527 = vld [vmem:[#allocation2 + $0x40] sm:$0xff]
        %v528 = vld [vmem:[#allocation2 + $0x48] sm:$0xff]
        %v529 = vld [vmem:[#allocation2 + $0x50] sm:$0xff]
        %v530 = vld [vmem:[#allocation2 + $0x58] sm:$0xff]
        %v531 = vld [vmem:[#allocation2 + $0x60] sm:$0xff]
        %v532 = vld [vmem:[#allocation2 + $0x68] sm:$0xff]
        %v533 = vld [vmem:[#allocation2 + $0x70] sm:$0xff]
        %v534 = vld [vmem:[#allocation2 + $0x78] sm:$0xff]
        %v535 = vpack.c.bf16 %v519, %v519
        %v536 = vpack.c.bf16 %v520, %v520
        %v537 = vpack.c.bf16 %v521, %v521
        %v538 = vpack.c.bf16 %v522, %v522
        %v539 = vpack.c.bf16 %v523, %v523
        %v540 = vpack.c.bf16 %v524, %v524
        %v541 = vpack.c.bf16 %v525, %v525
        %v542 = vpack.c.bf16 %v526, %v526
        %v543 = vpack.c.bf16 %v527, %v527
        %v544 = vpack.c.bf16 %v528, %v528
        %v545 = vpack.c.bf16 %v529, %v529
        %v546 = vpack.c.bf16 %v530, %v530
        %v547 = vpack.c.bf16 %v531, %v531
        %v548 = vpack.c.bf16 %v532, %v532
        %v549 = vpack.c.bf16 %v533, %v533
        %v550 = vpack.c.bf16 %v534, %v534
        %551 = vst [vmem:[%s261] sm:$0xf] %v535
        %552 = vst [vmem:[%s261 + $0x4] sm:$0xf] %v536
        %553 = vst [vmem:[%s261 + $0x8] sm:$0xf] %v537
        %554 = vst [vmem:[%s261 + $0xc] sm:$0xf] %v538
        %555 = vst [vmem:[%s261 + $0x10] sm:$0xf] %v539
        %556 = vst [vmem:[%s261 + $0x14] sm:$0xf] %v540
        %557 = vst [vmem:[%s261 + $0x18] sm:$0xf] %v541
        %558 = vst [vmem:[%s261 + $0x1c] sm:$0xf] %v542
        %559 = vst [vmem:[%s261 + $0x20] sm:$0xf] %v543
        %560 = vst [vmem:[%s261 + $0x24] sm:$0xf] %v544
        %561 = vst [vmem:[%s261 + $0x28] sm:$0xf] %v545
        %562 = vst [vmem:[%s261 + $0x2c] sm:$0xf] %v546
        %563 = vst [vmem:[%s261 + $0x30] sm:$0xf] %v547
        %564 = vst [vmem:[%s261 + $0x34] sm:$0xf] %v548
        %565 = vst [vmem:[%s261 + $0x38] sm:$0xf] %v549
        %566 = vst [vmem:[%s261 + $0x3c] sm:$0xf] %v550
        %567 = vst [vmem:[%s268] sm:$0xff] 0.0
        %v568 = vadd.f32 %v519, %v520
        %v569 = vadd.f32 %v568, %v521
        %v570 = vadd.f32 %v569, %v522
        %v571 = vadd.f32 %v570, %v523
        %v572 = vadd.f32 %v571, %v524
        %v573 = vadd.f32 %v572, %v525
        %v574 = vadd.f32 %v573, %v526
        %v575 = vadd.f32 %v574, %v527
        %v576 = vadd.f32 %v575, %v528
        %v577 = vadd.f32 %v576, %v529
        %v578 = vadd.f32 %v577, %v530
        %v579 = vadd.f32 %v578, %v531
        %v580 = vadd.f32 %v579, %v532
        %v581 = vadd.f32 %v580, %v533
        %v582 = vadd.f32 %v581, %v534
        %v583 = vrot.slane %v582, 4
        %v584 = vadd.f32 %v582, %v583
        %v585 = vrot.slane %v584, 2
        %v586 = vadd.f32 %v584, %v585
        %v587 = vrot.slane %v586, 1
        %v588 = vadd.f32 %v586, %v587
        %589 = vst [vmem:[%s268] sm:$0x1] %v588
        %v590 = vmul.f32 %v519, %v519
        %v591 = vmul.f32 %v520, %v520
        %v592 = vmul.f32 %v521, %v521
        %v593 = vmul.f32 %v522, %v522
        %v594 = vmul.f32 %v523, %v523
        %v595 = vmul.f32 %v524, %v524
        %v596 = vmul.f32 %v525, %v525
        %v597 = vmul.f32 %v526, %v526
        %v598 = vmul.f32 %v527, %v527
        %v599 = vmul.f32 %v528, %v528
        %v600 = vmul.f32 %v529, %v529
        %v601 = vmul.f32 %v530, %v530
        %v602 = vmul.f32 %v531, %v531
        %v603 = vmul.f32 %v532, %v532
        %v604 = vmul.f32 %v533, %v533
        %v605 = vmul.f32 %v534, %v534
        %v606 = vadd.f32 %v590, %v591
        %v607 = vadd.f32 %v606, %v592
        %v608 = vadd.f32 %v607, %v593
        %v609 = vadd.f32 %v608, %v594
        %v610 = vadd.f32 %v609, %v595
        %v611 = vadd.f32 %v610, %v596
        %v612 = vadd.f32 %v611, %v597
        %v613 = vadd.f32 %v612, %v598
        %v614 = vadd.f32 %v613, %v599
        %v615 = vadd.f32 %v614, %v600
        %v616 = vadd.f32 %v615, %v601
        %v617 = vadd.f32 %v616, %v602
        %v618 = vadd.f32 %v617, %v603
        %v619 = vadd.f32 %v618, %v604
        %v620 = vadd.f32 %v619, %v605
        %v621 = vrot.slane %v620, 4
        %v622 = vadd.f32 %v620, %v621
        %v623 = vrot.slane %v622, 2
        %v624 = vadd.f32 %v622, %v623
        %v625 = vrot.slane %v624, 1
        %v626 = vadd.f32 %v624, %v625
        %627 = vst [vmem:[%s268 + $0x1] sm:$0x1] %v626
      $region36: #{conv_block.2} parent=27 // pred_fallthru
        _
      %s628 = smul.u32 16, %s21
      %p629 = scmp.lt.s32.totalorder %s20, 1
      %s630 = scalar_select %p629, %s20, 1
      %p631 = scmp.lt.s32.totalorder %s628, 31
      %s632 = scalar_select %p631, %s628, 31
      %s633 = smul.addr %s630, 32
      %s634 = sadd.s32 %s632, %s633
      %s635 = smul.addr %s634, 4
      %s636 = scalar_lea.vmem %s2, %s635
      %s637 = smul.u32 %s20, 2
      %s638 = sadd.s32 %s637, %s21
      %p639 = scmp.lt.s32.totalorder %s638, 3
      %s640 = scalar_select %p639, %s638, 3
      %s641 = smul.addr %s640, 8
      %s642 = scalar_lea.vmem %s3, %s641
      // Predicated region
      $region37: #{conv_block.2} parent=27 // pred_check
        %p643 = pneg %p110
      $region38: #{conv_block.2} parent=27 // pred_check_branch
        %645 = sbr.rel (%p643) target = $region40
      $region39: #{conv_block.2} parent=27 // pred_region
        %s646 = smul.u32 16, %s21
      $region40: #{conv_block.2} parent=27 // pred_fallthru
        _
      // Predicated region
      $region41: #{conv_block.2} parent=27 // pred_check
        %p647 = pneg %p140
      $region42: #{conv_block.2} parent=27 // pred_check_branch
        %649 = sbr.rel (%p647) target = $region44
      $region43: #{conv_block.2} parent=27 // pred_region
        %s650 = smul.u32 %s20, 2
        %s651 = sadd.s32 %s650, %s21
      $region44: #{conv_block.2} parent=27 // pred_fallthru
        _
    $region28: #{conv_block.2} parent=5 // pred_fallthru
      _
    %p652 = scmp.le.s32.totalorder 2, %s10
    // Predicated region
    $region45: #{conv_block.2} parent=5 // pred_check
      %p653 = pneg %p652
    $region46: #{conv_block.2} parent=5 // pred_check_branch
      %655 = sbr.rel (%p653) target = $region48
    $region47: #{conv_block.2} parent=5 // pred_region
      %s656 = ssub.s32 %s10, 2
      // Predicated region
      $region49: #{conv_block.2} parent=47 // pred_check
        %p657 = pneg %p116
      $region50: #{conv_block.2} parent=47 // pred_check_branch
        %659 = sbr.rel (%p657) target = $region52
      $region51: #{conv_block.2} parent=47 // pred_region
        %s660 = smul.u32 16, %s24
        %p661 = scmp.lt.s32.totalorder %s23, 1
        %s662 = scalar_select %p661, %s23, 1
        %p663 = scmp.lt.s32.totalorder %s660, 31
        %s664 = scalar_select %p663, %s660, 31
        %s665 = smul.addr %s662, 32
        %s666 = sadd.s32 %s664, %s665
        %s667 = smul.addr %s666, 4
        %s668 = scalar_lea.vmem %s2, %s667
      $region52: #{conv_block.2} parent=47 // pred_fallthru
        _
      // Predicated region
      $region53: #{conv_block.2} parent=47 // pred_check
        %p669 = pneg %p146
      $region54: #{conv_block.2} parent=47 // pred_check_branch
        %671 = sbr.rel (%p669) target = $region56
      $region55: #{conv_block.2} parent=47 // pred_region
        %s672 = smul.u32 %s23, 2
        %s673 = sadd.s32 %s672, %s24
        %p674 = scmp.lt.s32.totalorder %s673, 3
        %s675 = scalar_select %p674, %s673, 3
        %s676 = smul.addr %s675, 8
        %s677 = scalar_lea.vmem %s3, %s676
      $region56: #{conv_block.2} parent=47 // pred_fallthru
        _
    $region48: #{conv_block.2} parent=5 // pred_fallthru
      _
  $region6: #{conv_block.2} parent=0 // loop_footer
    %s14 = sadd.s32 1, %s10
  $region7: #{conv_block.2} parent=0 // loop_footer_branch
    %9 = sbr.rel target = $region3
  $region8: #{conv_block.2} parent=0 // loop_exit
    _

</llo_original>
